<compile_context>
chip_gen: v5e
topology: v5e:2x2
jax: 0.10.0
libtpu: 0.0.40
codegen_flags: <defaults>
</compile_context>

<pallas_src>
import jax
import jax.numpy as jnp
from jax.experimental import pallas as pl
from jax.experimental.pallas import tpu as pltpu


_LANE = 128
_TILE_ROWS = 1024          # row tile (re-derived for bf16 weights + f32 temps)
_SMALL_ROWS = 256          # below this, a single full-row block is cheapest


def _round_up(x, m):
    return ((x + m - 1) // m) * m


def _concat_mlp_kernel(x_ref, w1_ref, b1_ref, w2_ref, b2_ref, w3_ref, b3_ref,
                       o_ref):
    # Layer 1: single fused matmul over the materialized concat
    # (bf16 operands, f32 accumulation), bias + ReLU in f32.
    h1 = jnp.dot(x_ref[...], w1_ref[...], preferred_element_type=jnp.float32)
    h1 = jnp.maximum(h1 + b1_ref[...], 0.0)
    # Layer 2: Linear + ReLU (cast activation to bf16 for the MXU).
    h2 = jnp.dot(h1.astype(jnp.bfloat16), w2_ref[...],
                 preferred_element_type=jnp.float32)
    h2 = jnp.maximum(h2 + b2_ref[...], 0.0)
    # Layer 3 (final): Linear, no activation (dropout=0.0 -> no-op).
    out = jnp.dot(h2.astype(jnp.bfloat16), w3_ref[...],
                  preferred_element_type=jnp.float32)
    o_ref[...] = (out + b3_ref[...]).astype(o_ref.dtype)


def concat_mlp_forward(xs, params, *, tile_rows=_TILE_ROWS):
    """xs: list of two arrays. params: dict of w1,b1,w2,b2,w3,b3.

    Mirrors ConcatMLP.forward: reshape 2-D input to match a 3-D partner,
    concat along the last axis, then run the 3-layer MLP (relu, dropout=0).
    """
    x0, x1 = xs
    # Torch's reshape_as branches (element counts must already match).
    # TODO(synk): torch uses reshape_as (not broadcast) here; for seq>1 the 2-D
    # tensor is reinterpreted rather than broadcast, and we keep that behavior.
    if x0.ndim == 3 and x1.ndim == 2:
        x1 = x1[:, None, :].reshape(x0.shape)
    if x1.ndim == 3 and x0.ndim == 2:
        x0 = x0[:, None, :].reshape(x1.shape)

    lead_shape = x0.shape[:-1]
    d0 = x0.shape[-1]
    d1 = x1.shape[-1]
    d_in = d0 + d1
    out_dtype = x0.dtype

    # Materialize the concat in the wrapper (narrowest streamed tensor) and
    # cast to bf16 so layer 1 is a single lane-/MXU-friendly matmul.
    z = jnp.concatenate([x0.reshape(-1, d0), x1.reshape(-1, d1)], axis=-1)
    z = z.astype(jnp.bfloat16)
    rows = z.shape[0]

    w1 = params["w1"]
    w2 = params["w2"]
    w3 = params["w3"]
    b1 = params["b1"].reshape(1, -1)
    b2 = params["b2"].reshape(1, -1)
    b3 = params["b3"].reshape(1, -1)
    h1_dim, h2_dim, out_dim = w1.shape[1], w2.shape[1], w3.shape[1]

    # Lane-dense padding of feature dims (exact with zero padding: padded
    # hidden columns are relu(0+0)=0 and padded weight rows multiply zeros).
    h1p = _round_up(h1_dim, _LANE)
    h2p = _round_up(h2_dim, _LANE)
    outp = _round_up(out_dim, _LANE)

    def pad2(a, r, c, dtype):
        a = a.astype(dtype)
        return jnp.pad(a, ((0, r - a.shape[0]), (0, c - a.shape[1])))

    w1_p = pad2(w1, d_in, h1p, jnp.bfloat16)
    w2_p = pad2(w2, h1p, h2p, jnp.bfloat16)
    w3_p = pad2(w3, h2p, outp, jnp.bfloat16)
    b1_p = pad2(b1, 1, h1p, jnp.float32)
    b2_p = pad2(b2, 1, h2p, jnp.float32)
    b3_p = pad2(b3, 1, outp, jnp.float32)

    # Row tiling: tiny inputs -> one full-row block; otherwise emit >= 2 row
    # blocks so the parallel axis can shard across both v7x TensorCores.
    if rows <= _SMALL_ROWS:
        tr = rows
        rows_p = rows
    else:
        n_blocks = max(2, -(-rows // tile_rows))
        tr = _round_up(-(-rows // n_blocks), 8)
        rows_p = _round_up(rows, tr)
    if rows_p != rows:
        z = jnp.pad(z, ((0, rows_p - rows), (0, 0)))

    grid = (rows_p // tr,)

    def row_spec(shape):
        return pl.BlockSpec(shape, lambda i: (i, 0))

    def const_spec(shape):
        # Resident operand: constant index_map + single-buffered pipeline.
        return pl.BlockSpec(shape, lambda i: (0, 0),
                            pipeline_mode=pl.Buffered(1))

    # Derive the VMEM budget from the actual footprint (plus slack) instead of
    # a flat limit, so the kernel also fits v7x's 64 MiB.
    out_bytes = jnp.dtype(out_dtype).itemsize
    vmem_bytes = (
        2 * (tr * d_in * 2)                                   # z tiles (x2 buf)
        + 2 * (tr * outp * out_bytes)                         # out tiles (x2)
        + 2 * (d_in * h1p + h1p * h2p + h2p * outp)           # bf16 weights (x1)
        + 4 * (h1p + h2p + outp)                              # f32 biases
        + tr * (h1p + h2p) * (4 + 2)                          # f32 + bf16 temps
    )
    vmem_limit = min(int(vmem_bytes) + (16 << 20), 128 << 20)

    flops = 2 * rows_p * (d_in * h1p + h1p * h2p + h2p * outp)
    bytes_accessed = (
        2 * rows_p * d_in                                     # streamed input
        + out_bytes * rows_p * outp                           # streamed output
        + 2 * (d_in * h1p + h1p * h2p + h2p * outp)           # weights (once)
        + 4 * (h1p + h2p + outp)                              # biases
    )

    out2d = pl.pallas_call(
        _concat_mlp_kernel,
        out_shape=jax.ShapeDtypeStruct((rows_p, outp), out_dtype),
        grid=grid,
        in_specs=[
            row_spec((tr, d_in)),      # concat'ed activations (streamed, bf16)
            const_spec((d_in, h1p)),   # w1 (resident, bf16)
            const_spec((1, h1p)),      # b1 (f32)
            const_spec((h1p, h2p)),    # w2
            const_spec((1, h2p)),      # b2
            const_spec((h2p, outp)),   # w3
            const_spec((1, outp)),     # b3
        ],
        out_specs=row_spec((tr, outp)),
        compiler_params=pltpu.CompilerParams(
            dimension_semantics=("parallel",),
            vmem_limit_bytes=vmem_limit,
        ),
        cost_estimate=pl.CostEstimate(
            flops=flops, transcendentals=0, bytes_accessed=bytes_accessed),
    )(z, w1_p, b1_p, w2_p, b2_p, w3_p, b3_p)

    out2d = out2d[:rows, :out_dim]
    return out2d.reshape(lead_shape + (out_dim,))


def init_params(key, input_dims, dimensions, output_dim, dtype=jnp.float32):
    """Deterministic init matching nn.Linear shapes (stored as (in, out))."""
    dims = [sum(input_dims)] + list(dimensions) + [output_dim]
    params = {}
    for i, (din, dout) in enumerate(zip(dims[:-1], dims[1:]), start=1):
        key, kw, kb = jax.random.split(key, 3)
        bound = 1.0 / (din ** 0.5)
        params[f"w{i}"] = jax.random.uniform(
            kw, (din, dout), dtype=dtype, minval=-bound, maxval=bound)
        params[f"b{i}"] = jax.random.uniform(
            kb, (1, dout), dtype=dtype, minval=-bound, maxval=bound)
    return params


def reference_forward(xs, params):
    """Pure-JAX f32 reference of ConcatMLP.forward for correctness checking."""
    x0, x1 = xs
    if x0.ndim == 3 and x1.ndim == 2:
        x1 = x1[:, None, :].reshape(x0.shape)
    if x1.ndim == 3 and x0.ndim == 2:
        x0 = x0[:, None, :].reshape(x1.shape)
    z = jnp.concatenate([x0, x1], axis=-1)
    z = jnp.maximum(z @ params["w1"] + params["b1"].reshape(1, -1), 0.0)
    z = jnp.maximum(z @ params["w2"] + params["b2"].reshape(1, -1), 0.0)
    z = z @ params["w3"] + params["b3"].reshape(1, -1)
    return z


if __name__ == "__main__":
    # Small, shape-consistent config:
    #   input_dims = [16, 16], dimensions = [32, 32], output_dim = 8
    #   x0: (2, 16), x1: (2, 16) -> concat (2, 32) -> out: (2, 8)
    key = jax.random.PRNGKey(0)
    k0, k1, kp, k2, k3 = jax.random.split(key, 5)

    input_dims = [16, 16]
    dimensions = [32, 32]   # hidden sizes (torch default would be [500, 500])
    output_dim = 8

    x0 = jax.random.normal(k0, (2, input_dims[0]), dtype=jnp.float32)
    x1 = jax.random.normal(k1, (2, input_dims[1]), dtype=jnp.float32)
    params = init_params(kp, input_dims, dimensions, output_dim)

    # bf16 matmul operands (f32 accumulate) -> loosened tolerance vs f32 ref.
    TOL = dict(atol=3e-2, rtol=3e-2)

    out = jax.block_until_ready(concat_mlp_forward([x0, x1], params))
    ref = reference_forward([x0, x1], params)
    assert out.shape == (2, output_dim), out.shape
    assert jnp.allclose(out, ref, **TOL), "mismatch vs reference"

    # Larger batch: exercises the multi-step ("parallel") row grid.
    xb0 = jax.random.normal(k2, (1100, input_dims[0]), dtype=jnp.float32)
    xb1 = jax.random.normal(k3, (1100, input_dims[1]), dtype=jnp.float32)
    outb = jax.block_until_ready(concat_mlp_forward([xb0, xb1], params))
    refb = reference_forward([xb0, xb1], params)
    assert outb.shape == (1100, output_dim), outb.shape
    assert jnp.allclose(outb, refb, **TOL), "mismatch (batched)"

    # TODO(synk): only 'relu' activation and dropout=0.0 (inference) are
    # implemented; other F.<activation> choices / training dropout are not.
    print("KERNEL_OK")
</pallas_src>

<mosaic_0001>
module attributes {stable_mosaic.version = 11 : i64} {
  func.func @_concat_mlp_kernel(%arg0: i32, %arg1: memref<2x32xbf16, #tpu.memory_space<vmem>>, %arg2: memref<32x128xbf16, #tpu.memory_space<vmem>>, %arg3: memref<1x128xf32, #tpu.memory_space<vmem>>, %arg4: memref<128x128xbf16, #tpu.memory_space<vmem>>, %arg5: memref<1x128xf32, #tpu.memory_space<vmem>>, %arg6: memref<128x128xbf16, #tpu.memory_space<vmem>>, %arg7: memref<1x128xf32, #tpu.memory_space<vmem>>, %arg8: memref<2x128xf32, #tpu.memory_space<vmem>>) attributes {dimension_semantics = [#tpu.dimension_semantics<parallel>], iteration_bounds = array<i64: 1>, scalar_prefetch = 0 : i64, scratch_operands = 0 : i64, tpu.core_type = #tpu.core_type<tc>, window_params = [{transform_indices = @transform_0, window_bounds = array<i64: 2, 32>}, {pipeline_mode = #tpu.pipeline_mode<synchronous>, transform_indices = @transform_1, window_bounds = array<i64: 32, 128>}, {pipeline_mode = #tpu.pipeline_mode<synchronous>, transform_indices = @transform_2, window_bounds = array<i64: 1, 128>}, {pipeline_mode = #tpu.pipeline_mode<synchronous>, transform_indices = @transform_3, window_bounds = array<i64: 128, 128>}, {pipeline_mode = #tpu.pipeline_mode<synchronous>, transform_indices = @transform_4, window_bounds = array<i64: 1, 128>}, {pipeline_mode = #tpu.pipeline_mode<synchronous>, transform_indices = @transform_5, window_bounds = array<i64: 128, 128>}, {pipeline_mode = #tpu.pipeline_mode<synchronous>, transform_indices = @transform_6, window_bounds = array<i64: 1, 128>}, {transform_indices = @transform_7, window_bounds = array<i64: 2, 128>}]} {
    %c0 = arith.constant 0 : index
    %c0_0 = arith.constant 0 : index
    %0 = vector.load %arg1[%c0, %c0_0] : memref<2x32xbf16, #tpu.memory_space<vmem>>, vector<2x32xbf16>
    %c0_1 = arith.constant 0 : index
    %c0_2 = arith.constant 0 : index
    %1 = vector.load %arg2[%c0_1, %c0_2] : memref<32x128xbf16, #tpu.memory_space<vmem>>, vector<32x128xbf16>
    %cst = arith.constant dense<0.000000e+00> : vector<2x128xf32>
    %2 = tpu.matmul %0, %1, %cst {dimension_numbers = #tpu.dot_dimension_numbers<[1], [0], [0], [1], [0, 0, 1, 1], [], []>} : vector<2x32xbf16>, vector<32x128xbf16>, vector<2x128xf32> -> vector<2x128xf32>
    %c0_3 = arith.constant 0 : index
    %c0_4 = arith.constant 0 : index
    %3 = vector.load %arg3[%c0_3, %c0_4] : memref<1x128xf32, #tpu.memory_space<vmem>>, vector<1x128xf32>
    %4 = vector.broadcast %3 : vector<1x128xf32> to vector<2x128xf32>
    %5 = arith.addf %2, %4 : vector<2x128xf32>
    %cst_5 = arith.constant 0.000000e+00 : f32
    %6 = vector.broadcast %cst_5 : f32 to vector<2x128xf32>
    %7 = arith.maximumf %5, %6 : vector<2x128xf32>
    %8 = arith.truncf %7 : vector<2x128xf32> to vector<2x128xbf16>
    %c0_6 = arith.constant 0 : index
    %c0_7 = arith.constant 0 : index
    %9 = vector.load %arg4[%c0_6, %c0_7] : memref<128x128xbf16, #tpu.memory_space<vmem>>, vector<128x128xbf16>
    %cst_8 = arith.constant dense<0.000000e+00> : vector<2x128xf32>
    %10 = tpu.matmul %8, %9, %cst_8 {dimension_numbers = #tpu.dot_dimension_numbers<[1], [0], [0], [1], [0, 0, 1, 1], [], []>} : vector<2x128xbf16>, vector<128x128xbf16>, vector<2x128xf32> -> vector<2x128xf32>
    %c0_9 = arith.constant 0 : index
    %c0_10 = arith.constant 0 : index
    %11 = vector.load %arg5[%c0_9, %c0_10] : memref<1x128xf32, #tpu.memory_space<vmem>>, vector<1x128xf32>
    %12 = vector.broadcast %11 : vector<1x128xf32> to vector<2x128xf32>
    %13 = arith.addf %10, %12 : vector<2x128xf32>
    %cst_11 = arith.constant 0.000000e+00 : f32
    %14 = vector.broadcast %cst_11 : f32 to vector<2x128xf32>
    %15 = arith.maximumf %13, %14 : vector<2x128xf32>
    %16 = arith.truncf %15 : vector<2x128xf32> to vector<2x128xbf16>
    %c0_12 = arith.constant 0 : index
    %c0_13 = arith.constant 0 : index
    %17 = vector.load %arg6[%c0_12, %c0_13] : memref<128x128xbf16, #tpu.memory_space<vmem>>, vector<128x128xbf16>
    %cst_14 = arith.constant dense<0.000000e+00> : vector<2x128xf32>
    %18 = tpu.matmul %16, %17, %cst_14 {dimension_numbers = #tpu.dot_dimension_numbers<[1], [0], [0], [1], [0, 0, 1, 1], [], []>} : vector<2x128xbf16>, vector<128x128xbf16>, vector<2x128xf32> -> vector<2x128xf32>
    %c0_15 = arith.constant 0 : index
    %c0_16 = arith.constant 0 : index
    %19 = vector.load %arg7[%c0_15, %c0_16] : memref<1x128xf32, #tpu.memory_space<vmem>>, vector<1x128xf32>
    %20 = vector.broadcast %19 : vector<1x128xf32> to vector<2x128xf32>
    %21 = arith.addf %18, %20 : vector<2x128xf32>
    %c0_17 = arith.constant 0 : index
    %c0_18 = arith.constant 0 : index
    %22 = vector.load %arg8[%c0_17, %c0_18] : memref<2x128xf32, #tpu.memory_space<vmem>>, vector<2x128xf32>
    tpu.vector_store %arg8[%c0_17, %c0_18], %21 {strides = array<i32>} : memref<2x128xf32, #tpu.memory_space<vmem>>, vector<2x128xf32>,
    return
  }
  func.func @transform_0(%arg0: i32) -> (i32, i32) {
    %c0_i32 = arith.constant 0 : i32
    %c0_i32_0 = arith.constant 0 : i32
    return %arg0, %c0_i32 : i32, i32
  }
  func.func @transform_1(%arg0: i32) -> (i32, i32) {
    %c0_i32 = arith.constant 0 : i32
    %c0_i32_0 = arith.constant 0 : i32
    %c0_i32_1 = arith.constant 0 : i32
    return %c0_i32, %c0_i32_0 : i32, i32
  }
  func.func @transform_2(%arg0: i32) -> (i32, i32) {
    %c0_i32 = arith.constant 0 : i32
    %c0_i32_0 = arith.constant 0 : i32
    %c0_i32_1 = arith.constant 0 : i32
    return %c0_i32, %c0_i32_0 : i32, i32
  }
  func.func @transform_3(%arg0: i32) -> (i32, i32) {
    %c0_i32 = arith.constant 0 : i32
    %c0_i32_0 = arith.constant 0 : i32
    %c0_i32_1 = arith.constant 0 : i32
    return %c0_i32, %c0_i32_0 : i32, i32
  }
  func.func @transform_4(%arg0: i32) -> (i32, i32) {
    %c0_i32 = arith.constant 0 : i32
    %c0_i32_0 = arith.constant 0 : i32
    %c0_i32_1 = arith.constant 0 : i32
    return %c0_i32, %c0_i32_0 : i32, i32
  }
  func.func @transform_5(%arg0: i32) -> (i32, i32) {
    %c0_i32 = arith.constant 0 : i32
    %c0_i32_0 = arith.constant 0 : i32
    %c0_i32_1 = arith.constant 0 : i32
    return %c0_i32, %c0_i32_0 : i32, i32
  }
  func.func @transform_6(%arg0: i32) -> (i32, i32) {
    %c0_i32 = arith.constant 0 : i32
    %c0_i32_0 = arith.constant 0 : i32
    %c0_i32_1 = arith.constant 0 : i32
    return %c0_i32, %c0_i32_0 : i32, i32
  }
  func.func @transform_7(%arg0: i32) -> (i32, i32) {
    %c0_i32 = arith.constant 0 : i32
    %c0_i32_0 = arith.constant 0 : i32
    return %arg0, %c0_i32 : i32, i32
  }
}

</mosaic_0001>

<llo_original>
// kernel: tpu_custom_call.1
$region0: #{tpu_custom_call.1}
  #allocation0 [shape = 'u32[]', space=smem, size = 0x4, offset = 0x4, fixed_abs, tag = 'smem constant byte address 0x4 - core index']
  #allocation1 [shape = 'u32[72,128]{1,0:T(1,128)}', space=vmem, size = 0x9000, scoped, tag = 'internal scratch']
  %s0 = inlined_call_operand.hbm [shape: bf16[2,32], index: 0, kind: input, shape index: {}]
  %s1 = inlined_call_operand.hbm [shape: bf16[32,128], index: 1, kind: input, shape index: {}]
  %s2 = inlined_call_operand.vmem [shape: f32[1,128], index: 2, kind: input, shape index: {}]
  %s3 = inlined_call_operand.hbm [shape: bf16[128,128], index: 3, kind: input, shape index: {}]
  %s4 = inlined_call_operand.vmem [shape: f32[1,128], index: 4, kind: input, shape index: {}]
  %s5 = inlined_call_operand.hbm [shape: bf16[128,128], index: 5, kind: input, shape index: {}]
  %s6 = inlined_call_operand.vmem [shape: f32[1,128], index: 6, kind: input, shape index: {}]
  %s7 = inlined_call_operand.hbm [shape: f32[2,128], index: 7, kind: output, shape index: {}]
  %s8 = sld [smem:[#allocation0]]
  $region54: #{tpu_custom_call.1} parent=0
    _
  %s10 = ssub.s32 1, %s8
  %s11 = scalar_select 0, %s10, %s8
  $region1: #{tpu_custom_call.1} parent=0
    #allocation2 [shape = 'u8[512]{0}', space=vmem, size = 0x400, scoped, tag = 'input window, operand 0, single buffered']
    #allocation3 [shape = 's32[1]{0}', space=sflag, size = 0x4, scoped, tag = 'scoped memory for tpu_custom_call.1']
    #allocation4 [shape = 's32[1]{0}', space=sflag, size = 0x4, scoped, tag = 'scoped memory for tpu_custom_call.1']
    #allocation5 [shape = 'u8[8192]{0}', space=vmem, size = 0x2000, scoped, tag = 'input window, operand 1, single buffered']
    #allocation6 [shape = 's32[1]{0}', space=sflag, size = 0x4, scoped, tag = 'scoped memory for tpu_custom_call.1']
    #allocation7 [shape = 'u8[32768]{0}', space=vmem, size = 0x8000, scoped, tag = 'input window, operand 3, single buffered']
    #allocation8 [shape = 'u8[32768]{0}', space=vmem, size = 0x8000, scoped, tag = 'input window, operand 5, single buffered']
    #allocation9 [shape = 's32[1]{0}', space=sflag, size = 0x4, scoped, tag = 'scoped memory for tpu_custom_call.1']
    #allocation10 [shape = 'u8[1024]{0}', space=vmem, size = 0x400, scoped, tag = 'output window, operand 0, single buffered']
    %12 = vsyncpa [#allocation3], 0
    %13 = vsyncpa [#allocation6], 0
    %14 = vsyncpa [#allocation9], 0
    %15 = vsyncpa [#allocation4], 0
    // Predicated region
    $region2: #{tpu_custom_call.1} parent=1 // pred_check
      _
    $region3: #{tpu_custom_call.1} parent=1 // pred_check_branch
      %17 = sbr.rel (0) target = $region5
    $region4: #{tpu_custom_call.1} parent=1 // pred_region
      %19 = vsyncadd [#allocation3], 0
      %s21 = sshll.u32 %s0, 4
      %s22 = int_to_ptr.hbm [resolvable:$true] %s21
      %s23 = sshll.u32 [#allocation2], 4
      %s24 = int_to_ptr.vmem [resolvable:$true] %s23
      %26 = dma.hbm_to_vmem [thread:$0]  %s22, 16, %s24, [#allocation3]
    $region5: #{tpu_custom_call.1} parent=1 // pred_fallthru
      _
    // Predicated region
    $region6: #{tpu_custom_call.1} parent=1 // pred_check
      _
    $region7: #{tpu_custom_call.1} parent=1 // pred_check_branch
      %28 = sbr.rel (0) target = $region9
    $region8: #{tpu_custom_call.1} parent=1 // pred_region
      %30 = vsyncadd [#allocation6], 0
      %s31 = sshll.u32 %s1, 4
      %s32 = int_to_ptr.hbm [resolvable:$true] %s31
      %s33 = sshll.u32 [#allocation5], 4
      %s34 = int_to_ptr.vmem [resolvable:$true] %s33
      %39 = dma.hbm_to_vmem [thread:$0]  %s32, 256, %s34, [#allocation6], 64, 64, 4
    $region9: #{tpu_custom_call.1} parent=1 // pred_fallthru
      _
    // Predicated region
    $region10: #{tpu_custom_call.1} parent=1 // pred_check
      _
    $region11: #{tpu_custom_call.1} parent=1 // pred_check_branch
      %41 = sbr.rel (0) target = $region13
    $region12: #{tpu_custom_call.1} parent=1 // pred_region
      _
    $region13: #{tpu_custom_call.1} parent=1 // pred_fallthru
      _
    // Predicated region
    $region14: #{tpu_custom_call.1} parent=1 // pred_check
      _
    $region15: #{tpu_custom_call.1} parent=1 // pred_check_branch
      %43 = sbr.rel (0) target = $region17
    $region16: #{tpu_custom_call.1} parent=1 // pred_region
      %45 = vsyncadd [#allocation6], 0
      %s46 = sshll.u32 %s3, 4
      %s47 = int_to_ptr.hbm [resolvable:$true] %s46
      %s48 = sshll.u32 [#allocation7], 4
      %s49 = int_to_ptr.vmem [resolvable:$true] %s48
      %54 = dma.hbm_to_vmem [thread:$0]  %s47, 1024, %s49, [#allocation6], 64, 64, 4
    $region17: #{tpu_custom_call.1} parent=1 // pred_fallthru
      _
    // Predicated region
    $region18: #{tpu_custom_call.1} parent=1 // pred_check
      _
    $region19: #{tpu_custom_call.1} parent=1 // pred_check_branch
      %56 = sbr.rel (0) target = $region21
    $region20: #{tpu_custom_call.1} parent=1 // pred_region
      _
    $region21: #{tpu_custom_call.1} parent=1 // pred_fallthru
      _
    // Predicated region
    $region22: #{tpu_custom_call.1} parent=1 // pred_check
      _
    $region23: #{tpu_custom_call.1} parent=1 // pred_check_branch
      %58 = sbr.rel (0) target = $region25
    $region24: #{tpu_custom_call.1} parent=1 // pred_region
      %60 = vsyncadd [#allocation9], 0
      %s61 = sshll.u32 %s5, 4
      %s62 = int_to_ptr.hbm [resolvable:$true] %s61
      %s63 = sshll.u32 [#allocation8], 4
      %s64 = int_to_ptr.vmem [resolvable:$true] %s63
      %69 = dma.hbm_to_vmem [thread:$0]  %s62, 1024, %s64, [#allocation9], 64, 64, 4
    $region25: #{tpu_custom_call.1} parent=1 // pred_fallthru
      _
    // Predicated region
    $region26: #{tpu_custom_call.1} parent=1 // pred_check
      _
    $region27: #{tpu_custom_call.1} parent=1 // pred_check_branch
      %71 = sbr.rel (0) target = $region29
    $region28: #{tpu_custom_call.1} parent=1 // pred_region
      _
    $region29: #{tpu_custom_call.1} parent=1 // pred_fallthru
      _
    // Predicated region
    $region30: #{tpu_custom_call.1} parent=1 // pred_check
      _
    $region31: #{tpu_custom_call.1} parent=1 // pred_check_branch
      %73 = sbr.rel (0) target = $region33
    $region32: #{tpu_custom_call.1} parent=1 // pred_region
      %75 = dma.done [#allocation3], 16
    $region33: #{tpu_custom_call.1} parent=1 // pred_fallthru
      _
    // Predicated region
    $region34: #{tpu_custom_call.1} parent=1 // pred_check
      _
    $region35: #{tpu_custom_call.1} parent=1 // pred_check_branch
      %77 = sbr.rel (0) target = $region37
    $region36: #{tpu_custom_call.1} parent=1 // pred_region
      %79 = dma.done [#allocation6], 256
    $region37: #{tpu_custom_call.1} parent=1 // pred_fallthru
      _
    // Predicated region
    $region38: #{tpu_custom_call.1} parent=1 // pred_check
      _
    $region39: #{tpu_custom_call.1} parent=1 // pred_check_branch
      %81 = sbr.rel (0) target = $region41
    $region40: #{tpu_custom_call.1} parent=1 // pred_region
      %83 = dma.done [#allocation6], 1024
    $region41: #{tpu_custom_call.1} parent=1 // pred_fallthru
      _
    // Predicated region
    $region42: #{tpu_custom_call.1} parent=1 // pred_check
      _
    $region43: #{tpu_custom_call.1} parent=1 // pred_check_branch
      %85 = sbr.rel (0) target = $region45
    $region44: #{tpu_custom_call.1} parent=1 // pred_region
      %87 = dma.done [#allocation9], 1024
    $region45: #{tpu_custom_call.1} parent=1 // pred_fallthru
      _
    %v89 = vld [vmem:[#allocation2] sm:$0x1]
    %v90 = vld [vmem:[#allocation5] sm:$0xf]
    %v91 = vld [vmem:[#allocation5 + $0x4] sm:$0xf]
    %v92 = vld [vmem:[#allocation5 + $0x8] sm:$0xf]
    %v93 = vld [vmem:[#allocation5 + $0xc] sm:$0xf]
    %v94 = vld [vmem:[%s2] sm:$0x1]
    %v96 = vperm.slane %v94, 0
    %v102 = vunpack.c.l.b16 %v90
    %v103 = vunpack.c.l.b16 %v91
    %v104 = vunpack.c.l.b16 %v92
    %v105 = vunpack.c.l.b16 %v93
    %v106 = vpack.c.b16 %v103, %v102
    %v107 = vpack.c.b16 %v105, %v104
    %vm110 = vcmask 261120
    %v112 = vsel %vm110, %v89, 0
    %114 = vmatpush.bf16.msra.mxu0 0
    %115 = vmatpush.bf16.msra.mxu0 0
    %116 = vmatpush.bf16.msra.mxu0 0
    %117 = vmatpush.bf16.msra.mxu0 0
    %118 = vmatpush.bf16.msra.mxu0 0
    %119 = vmatpush.bf16.msra.mxu0 0
    %120 = vmatpush.bf16.msra.mxu0 %v107
    %121 = vmatpush.bf16.msra.mxu0 %v106
    %122 = vmatmul.bf16.gmra.mxu0 %v112
    %v123 = vpop.f32.mrf.mxu0
    %v124 = vadd.f32 %v96, %v123
    %v125 = vpop.f32.mrf.mxu0
    %126 = vdwg.mxu0
    %v127 = vmax.f32 %v124, 0.0
    %v128 = vpack.c.bf16 %v127, %v127
    %v129 = vld [vmem:[#allocation7] sm:$0xf]
    %v130 = vld [vmem:[#allocation7 + $0x4] sm:$0xf]
    %v131 = vld [vmem:[#allocation7 + $0x8] sm:$0xf]
    %v132 = vld [vmem:[#allocation7 + $0xc] sm:$0xf]
    %v133 = vld [vmem:[#allocation7 + $0x10] sm:$0xf]
    %v134 = vld [vmem:[#allocation7 + $0x14] sm:$0xf]
    %v135 = vld [vmem:[#allocation7 + $0x18] sm:$0xf]
    %v136 = vld [vmem:[#allocation7 + $0x1c] sm:$0xf]
    %v137 = vld [vmem:[#allocation7 + $0x20] sm:$0xf]
    %v138 = vld [vmem:[#allocation7 + $0x24] sm:$0xf]
    %v139 = vld [vmem:[#allocation7 + $0x28] sm:$0xf]
    %v140 = vld [vmem:[#allocation7 + $0x2c] sm:$0xf]
    %v141 = vld [vmem:[#allocation7 + $0x30] sm:$0xf]
    %v142 = vld [vmem:[#allocation7 + $0x34] sm:$0xf]
    %v143 = vld [vmem:[#allocation7 + $0x38] sm:$0xf]
    %v144 = vld [vmem:[#allocation7 + $0x3c] sm:$0xf]
    %v145 = vld [vmem:[%s4] sm:$0x1]
    %v147 = vperm.slane %v145, 0
    %v165 = vunpack.c.l.b16 %v129
    %v166 = vunpack.c.l.b16 %v130
    %v167 = vunpack.c.l.b16 %v131
    %v168 = vunpack.c.l.b16 %v132
    %v169 = vunpack.c.l.b16 %v133
    %v170 = vunpack.c.l.b16 %v134
    %v171 = vunpack.c.l.b16 %v135
    %v172 = vunpack.c.l.b16 %v136
    %v173 = vunpack.c.l.b16 %v137
    %v174 = vunpack.c.l.b16 %v138
    %v175 = vunpack.c.l.b16 %v139
    %v176 = vunpack.c.l.b16 %v140
    %v177 = vunpack.c.l.b16 %v141
    %v178 = vunpack.c.l.b16 %v142
    %v179 = vunpack.c.l.b16 %v143
    %v180 = vunpack.c.l.b16 %v144
    %v181 = vpack.c.b16 %v166, %v165
    %v182 = vpack.c.b16 %v168, %v167
    %v183 = vpack.c.b16 %v170, %v169
    %v184 = vpack.c.b16 %v172, %v171
    %v185 = vpack.c.b16 %v174, %v173
    %v186 = vpack.c.b16 %v176, %v175
    %v187 = vpack.c.b16 %v178, %v177
    %v188 = vpack.c.b16 %v180, %v179
    %197 = vmatpush.bf16.msra.mxu0 %v188
    %198 = vmatpush.bf16.msra.mxu0 %v187
    %199 = vmatpush.bf16.msra.mxu0 %v186
    %200 = vmatpush.bf16.msra.mxu0 %v185
    %201 = vmatpush.bf16.msra.mxu0 %v184
    %202 = vmatpush.bf16.msra.mxu0 %v183
    %203 = vmatpush.bf16.msra.mxu0 %v182
    %204 = vmatpush.bf16.msra.mxu0 %v181
    %205 = vmatmul.bf16.gmra.mxu0 %v128
    %v206 = vpop.f32.mrf.mxu0
    %v207 = vadd.f32 %v147, %v206
    %v208 = vpop.f32.mrf.mxu0
    %209 = vdwg.mxu0
    %v210 = vmax.f32 %v207, 0.0
    %v211 = vpack.c.bf16 %v210, %v210
    %v212 = vld [vmem:[#allocation8] sm:$0xf]
    %v213 = vld [vmem:[#allocation8 + $0x4] sm:$0xf]
    %v214 = vld [vmem:[#allocation8 + $0x8] sm:$0xf]
    %v215 = vld [vmem:[#allocation8 + $0xc] sm:$0xf]
    %v216 = vld [vmem:[#allocation8 + $0x10] sm:$0xf]
    %v217 = vld [vmem:[#allocation8 + $0x14] sm:$0xf]
    %v218 = vld [vmem:[#allocation8 + $0x18] sm:$0xf]
    %v219 = vld [vmem:[#allocation8 + $0x1c] sm:$0xf]
    %v220 = vld [vmem:[#allocation8 + $0x20] sm:$0xf]
    %v221 = vld [vmem:[#allocation8 + $0x24] sm:$0xf]
    %v222 = vld [vmem:[#allocation8 + $0x28] sm:$0xf]
    %v223 = vld [vmem:[#allocation8 + $0x2c] sm:$0xf]
    %v224 = vld [vmem:[#allocation8 + $0x30] sm:$0xf]
    %v225 = vld [vmem:[#allocation8 + $0x34] sm:$0xf]
    %v226 = vld [vmem:[#allocation8 + $0x38] sm:$0xf]
    %v227 = vld [vmem:[#allocation8 + $0x3c] sm:$0xf]
    %v228 = vld [vmem:[%s6] sm:$0x1]
    %v230 = vperm.slane %v228, 0
    %v248 = vunpack.c.l.b16 %v212
    %v249 = vunpack.c.l.b16 %v213
    %v250 = vunpack.c.l.b16 %v214
    %v251 = vunpack.c.l.b16 %v215
    %v252 = vunpack.c.l.b16 %v216
    %v253 = vunpack.c.l.b16 %v217
    %v254 = vunpack.c.l.b16 %v218
    %v255 = vunpack.c.l.b16 %v219
    %v256 = vunpack.c.l.b16 %v220
    %v257 = vunpack.c.l.b16 %v221
    %v258 = vunpack.c.l.b16 %v222
    %v259 = vunpack.c.l.b16 %v223
    %v260 = vunpack.c.l.b16 %v224
    %v261 = vunpack.c.l.b16 %v225
    %v262 = vunpack.c.l.b16 %v226
    %v263 = vunpack.c.l.b16 %v227
    %v264 = vpack.c.b16 %v249, %v248
    %v265 = vpack.c.b16 %v251, %v250
    %v266 = vpack.c.b16 %v253, %v252
    %v267 = vpack.c.b16 %v255, %v254
    %v268 = vpack.c.b16 %v257, %v256
    %v269 = vpack.c.b16 %v259, %v258
    %v270 = vpack.c.b16 %v261, %v260
    %v271 = vpack.c.b16 %v263, %v262
    %280 = vmatpush.bf16.msra.mxu0 %v271
    %281 = vmatpush.bf16.msra.mxu0 %v270
    %282 = vmatpush.bf16.msra.mxu0 %v269
    %283 = vmatpush.bf16.msra.mxu0 %v268
    %284 = vmatpush.bf16.msra.mxu0 %v267
    %285 = vmatpush.bf16.msra.mxu0 %v266
    %286 = vmatpush.bf16.msra.mxu0 %v265
    %287 = vmatpush.bf16.msra.mxu0 %v264
    %288 = vmatmul.bf16.gmra.mxu0 %v211
    %v289 = vpop.f32.mrf.mxu0
    %v290 = vadd.f32 %v230, %v289
    %v291 = vpop.f32.mrf.mxu0
    %292 = vdwg.mxu0
    %293 = vst [vmem:[#allocation10] sm:$0x3] %v290
    // Predicated region
    $region46: #{tpu_custom_call.1} parent=1 // pred_check
      _
    $region47: #{tpu_custom_call.1} parent=1 // pred_check_branch
      %295 = sbr.rel (0) target = $region49
    $region48: #{tpu_custom_call.1} parent=1 // pred_region
      %297 = vsyncadd [#allocation4], 0
      %s299 = sshll.u32 [#allocation10], 4
      %s300 = int_to_ptr.vmem [resolvable:$true] %s299
      %s301 = sshll.u32 %s7, 4
      %s302 = int_to_ptr.hbm [resolvable:$true] %s301
      %304 = dma.vmem_to_hbm [thread:$0]  %s300, 32, %s302, [#allocation4]
    $region49: #{tpu_custom_call.1} parent=1 // pred_fallthru
      _
    // Predicated region
    $region50: #{tpu_custom_call.1} parent=1 // pred_check
      _
    $region51: #{tpu_custom_call.1} parent=1 // pred_check_branch
      %306 = sbr.rel (0) target = $region53
    $region52: #{tpu_custom_call.1} parent=1 // pred_region
      %308 = dma.done [#allocation4], 32
    $region53: #{tpu_custom_call.1} parent=1 // pred_fallthru
      _
    %309 = vsyncpa [#allocation3], 1
    %310 = vsyncpa [#allocation6], 1
    %311 = vsyncpa [#allocation9], 1
    %312 = vsyncpa [#allocation4], 1

</llo_original>
